<compile_context>
chip_gen: v7x
topology: tpu7x:2x2x1
jax: 0.10.0
libtpu: 0.0.40
codegen_flags: <defaults>
</compile_context>

<pallas_src>
import jax
import jax.numpy as jnp
import numpy as np
from jax import lax
from jax.experimental import pallas as pl
from jax.experimental.pallas import tpu as pltpu


# ---------------------------------------------------------------------------
# Fused kernel: TAC_input -> (mean ∘ TAC_mean) -> TAC_output -> GroupNorm
# -> residual add, all on a lane-dense (rows, G*N) layout.
# ---------------------------------------------------------------------------
def tac_fused_kernel(alpha_ref,                     # SMEM (3,)  PReLU slopes
                     x_ref,                         # (b_tile, T, G*N) f32, lane-dense
                     w1_ref, b1_ref,                # (GN, GH) bf16, (1, GH) f32   TAC_input (block-diag)
                     mw2_ref, b2_ref,               # (GH, H) bf16, (1, H) f32     mean folded into TAC_mean
                     w3a_ref, w3b_ref, b3_ref,      # (GH, GN) bf16, (H, GN) bf16, (1, GN) f32  TAC_output
                     sel_ref, selT_ref,             # (GN, G), (G, GN) f32         lane<->group selectors
                     gb_ref,                        # (2, GN) f32                  [gamma; beta] tiled
                     o_ref):                        # (b_tile, T, G*N) f32
    eps = 1e-5
    b_tile, T, GN = x_ref.shape
    G = sel_ref.shape[1]
    N = GN // G
    inv_cnt = 1.0 / float(N * T)
    a1, a2, a3 = alpha_ref[0], alpha_ref[1], alpha_ref[2]

    x = x_ref[...]                                   # (b_tile, T, GN) f32
    xr = x.reshape(b_tile * T, GN)                   # rows on sublanes, lane-dense GN

    # TAC_input: per-group Linear(N->H) as one block-diagonal bf16 matmul + PReLU (f32)
    h1 = jnp.dot(xr.astype(jnp.bfloat16), w1_ref[...],
                 preferred_element_type=jnp.float32) + b1_ref[...]
    h1 = jnp.where(h1 >= 0, h1, a1 * h1)             # (R, G*H) f32
    h1b = h1.astype(jnp.bfloat16)

    # group-mean folded into TAC_mean offline: m = h1 @ (Mmean @ W2) + b2, PReLU
    m = jnp.dot(h1b, mw2_ref[...], preferred_element_type=jnp.float32) + b2_ref[...]
    m = jnp.where(m >= 0, m, a2 * m)                 # (R, H) f32

    # TAC_output: Linear(2H->N) with the concat folded into split weights + PReLU
    y = (jnp.dot(h1b, w3a_ref[...], preferred_element_type=jnp.float32)
         + jnp.dot(m.astype(jnp.bfloat16), w3b_ref[...],
                   preferred_element_type=jnp.float32)
         + b3_ref[...])
    y = jnp.where(y >= 0, y, a3 * y)                 # (R, G*N) f32
    y3 = y.reshape(b_tile, T, GN)

    # Single-pass GroupNorm(1, N) per (batch, group): column sums + sums of
    # squares, tiny selector matmuls for the per-group stats (f32 throughout),
    # then one fused scale/shift + residual store.
    col_sum = jnp.sum(y3, axis=1)                                              # (b_tile, GN)
    col_sq = jnp.sum(y3 * y3, axis=1)                                          # (b_tile, GN)
    mu = jnp.dot(col_sum, sel_ref[...], preferred_element_type=jnp.float32) * inv_cnt    # (b_tile, G)
    ex2 = jnp.dot(col_sq, sel_ref[...], preferred_element_type=jnp.float32) * inv_cnt    # (b_tile, G)
    var = jnp.maximum(ex2 - mu * mu, 0.0)                                      # guard cancellation
    inv_std = lax.rsqrt(var + eps)                                             # EUP slot
    mu_row = jnp.dot(mu, selT_ref[...], preferred_element_type=jnp.float32)    # (b_tile, GN)
    inv_row = jnp.dot(inv_std, selT_ref[...], preferred_element_type=jnp.float32)
    gb = gb_ref[...]
    scale = inv_row * gb[0:1, :]                                               # inv_std * gamma
    shift = gb[1:2, :] - mu_row * scale                                        # beta - mu * scale
    o_ref[...] = x + y3 * scale[:, None, :] + shift[:, None, :]


# ---------------------------------------------------------------------------
# Tiling helpers (generation-aware)
# ---------------------------------------------------------------------------
def _num_tensorcores():
    """2 on megacore-style chips (v7x/v4/v5p), 1 on single-TC v5e/v6e."""
    try:
        kind = jax.devices()[0].device_kind.lower()
    except Exception:
        return 2
    if "v5 lite" in kind or "v5e" in kind or "v5litepod" in kind or "v6" in kind:
        return 1
    return 2


def _pick_b_tile(B, T, GN, n_cores):
    # Budget 2x double-buffered input + 2x output pipelined tiles PLUS ~6
    # tile-sized f32 in-kernel temporaries (h1/y/bf16 copies/products), all
    # under the most conservative scoped-VMEM default (v5e: 16 MiB).
    budget = 12 << 20
    per_row = T * GN * 4
    b_tile = 1
    for c in range(1, B + 1):
        if B % c:
            continue
        fits = 10 * c * per_row <= budget
        steps_ok = (B // c >= n_cores) or (B < n_cores)
        if fits and steps_ok:
            b_tile = c
    return b_tile


# ---------------------------------------------------------------------------
# Lane-dense entry point (B, T, G*N) -> (B, T, G*N): the hot path.
# ---------------------------------------------------------------------------
def tac_forward_lane_dense(x_td, packed):
    B, T, GN = x_td.shape
    b_tile = _pick_b_tile(B, T, GN, _num_tensorcores())
    nb = B // b_tile

    blk = pl.BlockSpec((b_tile, T, GN), lambda b: (b, 0, 0))

    weight_names = ["W1_bd", "b1_t", "MmW2", "b2_t",
                    "W3a_bd", "W3b_t", "b3_t", "sel", "selT", "gb"]
    weights = [packed[k] for k in weight_names]
    weight_specs = [pl.BlockSpec(w.shape, lambda b: (0, 0)) for w in weights]

    return pl.pallas_call(
        tac_fused_kernel,
        grid=(nb,),
        out_shape=jax.ShapeDtypeStruct((B, T, GN), jnp.float32),
        in_specs=[pl.BlockSpec(memory_space=pltpu.MemorySpace.SMEM), blk] + weight_specs,
        out_specs=blk,
        compiler_params=pltpu.CompilerParams(dimension_semantics=("parallel",)),
    )(packed["alphas"], x_td, *weights)


# ---------------------------------------------------------------------------
# (B, G, N, T) wrapper: layout plumbing only at the model boundary.  Keep the
# surrounding graph in the (B, T, G*N) layout and call the lane-dense entry
# point directly to avoid these two HBM transposes entirely.
# ---------------------------------------------------------------------------
def tac_forward(x, packed):
    B, G, N, T = x.shape
    x_td = jnp.transpose(x, (0, 3, 1, 2)).reshape(B, T, G * N)
    out_td = tac_forward_lane_dense(x_td, packed)
    return jnp.transpose(out_td.reshape(B, T, G, N), (0, 2, 3, 1))


# ---------------------------------------------------------------------------
# Parameters: natural PyTorch-shaped params + lane-dense packed operands.
# ---------------------------------------------------------------------------
def init_params(key, N, H):
    ks = jax.random.split(key, 9)
    s1, s2, s3 = 1.0 / np.sqrt(N), 1.0 / np.sqrt(H), 1.0 / np.sqrt(2 * H)
    return dict(
        W1=jax.random.uniform(ks[0], (N, H), jnp.float32, -s1, s1),   # Linear(N, H), (in, out)
        b1=jax.random.uniform(ks[1], (H,), jnp.float32, -s1, s1),
        W2=jax.random.uniform(ks[2], (H, H), jnp.float32, -s2, s2),   # Linear(H, H)
        b2=jax.random.uniform(ks[3], (H,), jnp.float32, -s2, s2),
        W3a=jax.random.uniform(ks[4], (H, N), jnp.float32, -s3, s3),  # Linear(2H, N) split
        W3b=jax.random.uniform(ks[5], (H, N), jnp.float32, -s3, s3),
        b3=jax.random.uniform(ks[6], (N,), jnp.float32, -s3, s3),
        a1=jnp.float32(0.25), a2=jnp.float32(0.25), a3=jnp.float32(0.25),  # PReLU defaults
        gamma=1.0 + 0.1 * jax.random.normal(ks[7], (N,), jnp.float32),     # GroupNorm affine
        beta=0.1 * jax.random.normal(ks[8], (N,), jnp.float32),
    )


def pack_params(p, G):
    """Build lane-dense kernel operands (block-diag / tiled / folded weights).

    MXU weights are stored in bf16 (v6e/v7x fast path, also fine on v5e);
    biases, selectors and GroupNorm affine stay f32.
    """
    N, H = p["W1"].shape
    eye_g = jnp.eye(G, dtype=jnp.float32)
    mmean = jnp.kron(jnp.ones((G, 1), jnp.float32) / G,
                     jnp.eye(H, dtype=jnp.float32))                          # (GH, H)
    return dict(
        alphas=jnp.stack([p["a1"], p["a2"], p["a3"]]).astype(jnp.float32),   # (3,)
        W1_bd=jnp.kron(eye_g, p["W1"]).astype(jnp.bfloat16),                 # (GN, GH)
        b1_t=jnp.tile(p["b1"], G)[None, :],                                  # (1, GH)
        MmW2=(mmean @ p["W2"]).astype(jnp.bfloat16),                         # (GH, H) mean folded in
        b2_t=p["b2"][None, :],                                               # (1, H)
        W3a_bd=jnp.kron(eye_g, p["W3a"]).astype(jnp.bfloat16),               # (GH, GN)
        W3b_t=jnp.kron(jnp.ones((1, G), jnp.float32),
                       p["W3b"]).astype(jnp.bfloat16),                       # (H, GN)
        b3_t=jnp.tile(p["b3"], G)[None, :],                                  # (1, GN)
        sel=jnp.kron(eye_g, jnp.ones((N, 1), jnp.float32)),                  # (GN, G)
        selT=jnp.kron(eye_g, jnp.ones((1, N), jnp.float32)),                 # (G, GN)
        gb=jnp.stack([jnp.tile(p["gamma"], G),
                      jnp.tile(p["beta"], G)], axis=0),                      # (2, GN)
    )


# ---------------------------------------------------------------------------
# Pure-JAX f32 reference (mirrors the PyTorch forward exactly)
# ---------------------------------------------------------------------------
def tac_reference(x, p):
    B, G, N, T = x.shape
    H = p["W1"].shape[1]
    xi = jnp.transpose(x, (0, 3, 1, 2)).reshape(-1, N)              # (B*T*G, N)
    h1 = xi @ p["W1"] + p["b1"]
    h1 = jnp.where(h1 >= 0, h1, p["a1"] * h1)
    h1 = h1.reshape(B * T, G, H)
    m = h1.mean(1)
    m = m @ p["W2"] + p["b2"]
    m = jnp.where(m >= 0, m, p["a2"] * m)
    mexp = jnp.broadcast_to(m[:, None, :], (B * T, G, H))
    cat = jnp.concatenate([h1, mexp], axis=2).reshape(-1, 2 * H)
    W3 = jnp.concatenate([p["W3a"], p["W3b"]], axis=0)              # (2H, N)
    o = cat @ W3 + p["b3"]
    o = jnp.where(o >= 0, o, p["a3"] * o)
    o = o.reshape(B, T, G, N).transpose(0, 2, 3, 1).reshape(B * G, N, T)
    mu = o.mean(axis=(1, 2), keepdims=True)
    var = ((o - mu) ** 2).mean(axis=(1, 2), keepdims=True)
    o = (o - mu) / jnp.sqrt(var + 1e-5)
    o = o * p["gamma"][None, :, None] + p["beta"][None, :, None]
    return x + o.reshape(B, G, N, T)


if __name__ == "__main__":
    B, G, N, T, H = 2, 4, 32, 8, 32     # batch, groups, input_size, time, hidden_size
    key = jax.random.PRNGKey(0)
    kx, kp = jax.random.split(key)
    x = jax.random.normal(kx, (B, G, N, T), jnp.float32)
    params = init_params(kp, N, H)
    packed = pack_params(params, G)

    out = jax.jit(tac_forward)(x, packed)
    out = jax.block_until_ready(out)

    ref = tac_reference(x, params)
    # bf16 MXU operands -> tolerance loosened from 2e-4 to 3e-2 (per review).
    np.testing.assert_allclose(np.asarray(out), np.asarray(ref), rtol=3e-2, atol=3e-2)
    print("KERNEL_OK")
</pallas_src>

<mosaic_0001>
module attributes {stable_mosaic.version = 11 : i64} {
  func.func @tac_fused_kernel(%arg0: i32, %arg1: memref<3xf32, #tpu.memory_space<smem>>, %arg2: memref<1x8x128xf32, #tpu.memory_space<vmem>>, %arg3: memref<128x128xbf16, #tpu.memory_space<vmem>>, %arg4: memref<1x128xf32, #tpu.memory_space<vmem>>, %arg5: memref<128x32xbf16, #tpu.memory_space<vmem>>, %arg6: memref<1x32xf32, #tpu.memory_space<vmem>>, %arg7: memref<128x128xbf16, #tpu.memory_space<vmem>>, %arg8: memref<32x128xbf16, #tpu.memory_space<vmem>>, %arg9: memref<1x128xf32, #tpu.memory_space<vmem>>, %arg10: memref<128x4xf32, #tpu.memory_space<vmem>>, %arg11: memref<4x128xf32, #tpu.memory_space<vmem>>, %arg12: memref<2x128xf32, #tpu.memory_space<vmem>>, %arg13: memref<1x8x128xf32, #tpu.memory_space<vmem>>) attributes {dimension_semantics = [#tpu.dimension_semantics<parallel>], iteration_bounds = array<i64: 2>, scalar_prefetch = 0 : i64, scratch_operands = 0 : i64, tpu.core_type = #tpu.core_type<tc>, window_params = [{transform_indices = @transform_0, window_bounds = array<i64: 3>}, {transform_indices = @transform_1, window_bounds = array<i64: 1, 8, 128>}, {pipeline_mode = #tpu.pipeline_mode<synchronous>, transform_indices = @transform_2, window_bounds = array<i64: 128, 128>}, {pipeline_mode = #tpu.pipeline_mode<synchronous>, transform_indices = @transform_3, window_bounds = array<i64: 1, 128>}, {pipeline_mode = #tpu.pipeline_mode<synchronous>, transform_indices = @transform_4, window_bounds = array<i64: 128, 32>}, {pipeline_mode = #tpu.pipeline_mode<synchronous>, transform_indices = @transform_5, window_bounds = array<i64: 1, 32>}, {pipeline_mode = #tpu.pipeline_mode<synchronous>, transform_indices = @transform_6, window_bounds = array<i64: 128, 128>}, {pipeline_mode = #tpu.pipeline_mode<synchronous>, transform_indices = @transform_7, window_bounds = array<i64: 32, 128>}, {pipeline_mode = #tpu.pipeline_mode<synchronous>, transform_indices = @transform_8, window_bounds = array<i64: 1, 128>}, {pipeline_mode = #tpu.pipeline_mode<synchronous>, transform_indices = @transform_9, window_bounds = array<i64: 128, 4>}, {pipeline_mode = #tpu.pipeline_mode<synchronous>, transform_indices = @transform_10, window_bounds = array<i64: 4, 128>}, {pipeline_mode = #tpu.pipeline_mode<synchronous>, transform_indices = @transform_11, window_bounds = array<i64: 2, 128>}, {transform_indices = @transform_12, window_bounds = array<i64: 1, 8, 128>}]} {
    %c0 = arith.constant 0 : index
    %0 = memref.load %arg1[%c0] : memref<3xf32, #tpu.memory_space<smem>>
    %c1 = arith.constant 1 : index
    %1 = memref.load %arg1[%c1] : memref<3xf32, #tpu.memory_space<smem>>
    %c2 = arith.constant 2 : index
    %2 = memref.load %arg1[%c2] : memref<3xf32, #tpu.memory_space<smem>>
    %c0_0 = arith.constant 0 : index
    %c0_1 = arith.constant 0 : index
    %c0_2 = arith.constant 0 : index
    %3 = vector.load %arg2[%c0_0, %c0_1, %c0_2] : memref<1x8x128xf32, #tpu.memory_space<vmem>>, vector<1x8x128xf32>
    %4 = vector.shape_cast %3 : vector<1x8x128xf32> to vector<8x128xf32>
    %5 = arith.truncf %4 : vector<8x128xf32> to vector<8x128xbf16>
    %c0_3 = arith.constant 0 : index
    %c0_4 = arith.constant 0 : index
    %6 = vector.load %arg3[%c0_3, %c0_4] : memref<128x128xbf16, #tpu.memory_space<vmem>>, vector<128x128xbf16>
    %cst = arith.constant dense<0.000000e+00> : vector<8x128xf32>
    %7 = tpu.matmul %5, %6, %cst {dimension_numbers = #tpu.dot_dimension_numbers<[1], [0], [0], [1], [0, 0, 1, 1], [], []>} : vector<8x128xbf16>, vector<128x128xbf16>, vector<8x128xf32> -> vector<8x128xf32>
    %c0_5 = arith.constant 0 : index
    %c0_6 = arith.constant 0 : index
    %8 = vector.load %arg4[%c0_5, %c0_6] : memref<1x128xf32, #tpu.memory_space<vmem>>, vector<1x128xf32>
    %9 = vector.broadcast %8 : vector<1x128xf32> to vector<8x128xf32>
    %10 = arith.addf %7, %9 : vector<8x128xf32>
    %cst_7 = arith.constant 0.000000e+00 : f32
    %11 = vector.broadcast %cst_7 : f32 to vector<8x128xf32>
    %12 = arith.cmpf oge, %10, %11 : vector<8x128xf32>
    %13 = vector.broadcast %0 : f32 to vector<8x128xf32>
    %14 = arith.mulf %13, %10 : vector<8x128xf32>
    %15 = arith.select %12, %10, %14 : vector<8x128xi1>, vector<8x128xf32>
    %16 = arith.truncf %15 : vector<8x128xf32> to vector<8x128xbf16>
    %c0_8 = arith.constant 0 : index
    %c0_9 = arith.constant 0 : index
    %17 = vector.load %arg5[%c0_8, %c0_9] : memref<128x32xbf16, #tpu.memory_space<vmem>>, vector<128x32xbf16>
    %cst_10 = arith.constant dense<0.000000e+00> : vector<8x32xf32>
    %18 = tpu.matmul %16, %17, %cst_10 {dimension_numbers = #tpu.dot_dimension_numbers<[1], [0], [0], [1], [0, 0, 1, 1], [], []>} : vector<8x128xbf16>, vector<128x32xbf16>, vector<8x32xf32> -> vector<8x32xf32>
    %c0_11 = arith.constant 0 : index
    %c0_12 = arith.constant 0 : index
    %19 = vector.load %arg6[%c0_11, %c0_12] : memref<1x32xf32, #tpu.memory_space<vmem>>, vector<1x32xf32>
    %20 = vector.broadcast %19 : vector<1x32xf32> to vector<8x32xf32>
    %21 = arith.addf %18, %20 : vector<8x32xf32>
    %cst_13 = arith.constant 0.000000e+00 : f32
    %22 = vector.broadcast %cst_13 : f32 to vector<8x32xf32>
    %23 = arith.cmpf oge, %21, %22 : vector<8x32xf32>
    %24 = vector.broadcast %1 : f32 to vector<8x32xf32>
    %25 = arith.mulf %24, %21 : vector<8x32xf32>
    %26 = arith.select %23, %21, %25 : vector<8x32xi1>, vector<8x32xf32>
    %c0_14 = arith.constant 0 : index
    %c0_15 = arith.constant 0 : index
    %27 = vector.load %arg7[%c0_14, %c0_15] : memref<128x128xbf16, #tpu.memory_space<vmem>>, vector<128x128xbf16>
    %cst_16 = arith.constant dense<0.000000e+00> : vector<8x128xf32>
    %28 = tpu.matmul %16, %27, %cst_16 {dimension_numbers = #tpu.dot_dimension_numbers<[1], [0], [0], [1], [0, 0, 1, 1], [], []>} : vector<8x128xbf16>, vector<128x128xbf16>, vector<8x128xf32> -> vector<8x128xf32>
    %29 = arith.truncf %26 : vector<8x32xf32> to vector<8x32xbf16>
    %c0_17 = arith.constant 0 : index
    %c0_18 = arith.constant 0 : index
    %30 = vector.load %arg8[%c0_17, %c0_18] : memref<32x128xbf16, #tpu.memory_space<vmem>>, vector<32x128xbf16>
    %cst_19 = arith.constant dense<0.000000e+00> : vector<8x128xf32>
    %31 = tpu.matmul %29, %30, %cst_19 {dimension_numbers = #tpu.dot_dimension_numbers<[1], [0], [0], [1], [0, 0, 1, 1], [], []>} : vector<8x32xbf16>, vector<32x128xbf16>, vector<8x128xf32> -> vector<8x128xf32>
    %32 = arith.addf %28, %31 : vector<8x128xf32>
    %c0_20 = arith.constant 0 : index
    %c0_21 = arith.constant 0 : index
    %33 = vector.load %arg9[%c0_20, %c0_21] : memref<1x128xf32, #tpu.memory_space<vmem>>, vector<1x128xf32>
    %34 = vector.broadcast %33 : vector<1x128xf32> to vector<8x128xf32>
    %35 = arith.addf %32, %34 : vector<8x128xf32>
    %cst_22 = arith.constant 0.000000e+00 : f32
    %36 = vector.broadcast %cst_22 : f32 to vector<8x128xf32>
    %37 = arith.cmpf oge, %35, %36 : vector<8x128xf32>
    %38 = vector.broadcast %2 : f32 to vector<8x128xf32>
    %39 = arith.mulf %38, %35 : vector<8x128xf32>
    %40 = arith.select %37, %35, %39 : vector<8x128xi1>, vector<8x128xf32>
    %41 = vector.shape_cast %40 : vector<8x128xf32> to vector<1x8x128xf32>
    %cst_23 = arith.constant dense<0.000000e+00> : vector<1x128xf32>
    %42 = vector.multi_reduction <add>, %41, %cst_23 [1] : vector<1x8x128xf32> to vector<1x128xf32>
    %43 = arith.mulf %41, %41 : vector<1x8x128xf32>
    %cst_24 = arith.constant dense<0.000000e+00> : vector<1x128xf32>
    %44 = vector.multi_reduction <add>, %43, %cst_24 [1] : vector<1x8x128xf32> to vector<1x128xf32>
    %c0_25 = arith.constant 0 : index
    %c0_26 = arith.constant 0 : index
    %45 = vector.load %arg10[%c0_25, %c0_26] : memref<128x4xf32, #tpu.memory_space<vmem>>, vector<128x4xf32>
    %cst_27 = arith.constant dense<0.000000e+00> : vector<1x4xf32>
    %46 = tpu.matmul %42, %45, %cst_27 {dimension_numbers = #tpu.dot_dimension_numbers<[1], [0], [0], [1], [0, 0, 1, 1], [], []>} : vector<1x128xf32>, vector<128x4xf32>, vector<1x4xf32> -> vector<1x4xf32>
    %cst_28 = arith.constant 3.906250e-03 : f32
    %47 = vector.broadcast %cst_28 : f32 to vector<1x4xf32>
    %48 = arith.mulf %46, %47 : vector<1x4xf32>
    %c0_29 = arith.constant 0 : index
    %c0_30 = arith.constant 0 : index
    %49 = vector.load %arg10[%c0_29, %c0_30] : memref<128x4xf32, #tpu.memory_space<vmem>>, vector<128x4xf32>
    %cst_31 = arith.constant dense<0.000000e+00> : vector<1x4xf32>
    %50 = tpu.matmul %44, %49, %cst_31 {dimension_numbers = #tpu.dot_dimension_numbers<[1], [0], [0], [1], [0, 0, 1, 1], [], []>} : vector<1x128xf32>, vector<128x4xf32>, vector<1x4xf32> -> vector<1x4xf32>
    %cst_32 = arith.constant 3.906250e-03 : f32
    %51 = vector.broadcast %cst_32 : f32 to vector<1x4xf32>
    %52 = arith.mulf %50, %51 : vector<1x4xf32>
    %53 = arith.mulf %48, %48 : vector<1x4xf32>
    %54 = arith.subf %52, %53 : vector<1x4xf32>
    %cst_33 = arith.constant 0.000000e+00 : f32
    %55 = vector.broadcast %cst_33 : f32 to vector<1x4xf32>
    %56 = arith.maximumf %54, %55 : vector<1x4xf32>
    %cst_34 = arith.constant 9.99999974E-6 : f32
    %57 = vector.broadcast %cst_34 : f32 to vector<1x4xf32>
    %58 = arith.addf %56, %57 : vector<1x4xf32>
    %59 = math.rsqrt %58 : vector<1x4xf32>
    %c0_35 = arith.constant 0 : index
    %c0_36 = arith.constant 0 : index
    %60 = vector.load %arg11[%c0_35, %c0_36] : memref<4x128xf32, #tpu.memory_space<vmem>>, vector<4x128xf32>
    %cst_37 = arith.constant dense<0.000000e+00> : vector<1x128xf32>
    %61 = tpu.matmul %48, %60, %cst_37 {dimension_numbers = #tpu.dot_dimension_numbers<[1], [0], [0], [1], [0, 0, 1, 1], [], []>} : vector<1x4xf32>, vector<4x128xf32>, vector<1x128xf32> -> vector<1x128xf32>
    %c0_38 = arith.constant 0 : index
    %c0_39 = arith.constant 0 : index
    %62 = vector.load %arg11[%c0_38, %c0_39] : memref<4x128xf32, #tpu.memory_space<vmem>>, vector<4x128xf32>
    %cst_40 = arith.constant dense<0.000000e+00> : vector<1x128xf32>
    %63 = tpu.matmul %59, %62, %cst_40 {dimension_numbers = #tpu.dot_dimension_numbers<[1], [0], [0], [1], [0, 0, 1, 1], [], []>} : vector<1x4xf32>, vector<4x128xf32>, vector<1x128xf32> -> vector<1x128xf32>
    %c0_41 = arith.constant 0 : index
    %c0_42 = arith.constant 0 : index
    %64 = vector.load %arg12[%c0_41, %c0_42] : memref<2x128xf32, #tpu.memory_space<vmem>>, vector<2x128xf32>
    %65 = vector.extract_strided_slice %64 {offsets = [0, 0], sizes = [1, 128], strides = [1, 1]} : vector<2x128xf32> to vector<1x128xf32>
    %66 = arith.mulf %63, %65 : vector<1x128xf32>
    %67 = vector.extract_strided_slice %64 {offsets = [1, 0], sizes = [1, 128], strides = [1, 1]} : vector<2x128xf32> to vector<1x128xf32>
    %68 = arith.mulf %61, %66 : vector<1x128xf32>
    %69 = arith.subf %67, %68 : vector<1x128xf32>
    %70 = vector.shape_cast %66 : vector<1x128xf32> to vector<1x1x128xf32>
    %71 = vector.broadcast %70 : vector<1x1x128xf32> to vector<1x8x128xf32>
    %72 = arith.mulf %41, %71 : vector<1x8x128xf32>
    %73 = arith.addf %3, %72 : vector<1x8x128xf32>
    %74 = vector.shape_cast %69 : vector<1x128xf32> to vector<1x1x128xf32>
    %75 = vector.broadcast %74 : vector<1x1x128xf32> to vector<1x8x128xf32>
    %76 = arith.addf %73, %75 : vector<1x8x128xf32>
    %c0_43 = arith.constant 0 : index
    %c0_44 = arith.constant 0 : index
    %c0_45 = arith.constant 0 : index
    %77 = vector.load %arg13[%c0_43, %c0_44, %c0_45] : memref<1x8x128xf32, #tpu.memory_space<vmem>>, vector<1x8x128xf32>
    tpu.vector_store %arg13[%c0_43, %c0_44, %c0_45], %76 {strides = array<i32>} : memref<1x8x128xf32, #tpu.memory_space<vmem>>, vector<1x8x128xf32>,
    return
  }
  func.func @transform_0(%arg0: i32) -> i32 {
    %c0_i32 = arith.constant 0 : i32
    %c0_i32_0 = arith.constant 0 : i32
    return %c0_i32 : i32
  }
  func.func @transform_1(%arg0: i32) -> (i32, i32, i32) {
    %c0_i32 = arith.constant 0 : i32
    %c0_i32_0 = arith.constant 0 : i32
    %c0_i32_1 = arith.constant 0 : i32
    return %arg0, %c0_i32, %c0_i32_0 : i32, i32, i32
  }
  func.func @transform_2(%arg0: i32) -> (i32, i32) {
    %c0_i32 = arith.constant 0 : i32
    %c0_i32_0 = arith.constant 0 : i32
    %c0_i32_1 = arith.constant 0 : i32
    return %c0_i32, %c0_i32_0 : i32, i32
  }
  func.func @transform_3(%arg0: i32) -> (i32, i32) {
    %c0_i32 = arith.constant 0 : i32
    %c0_i32_0 = arith.constant 0 : i32
    %c0_i32_1 = arith.constant 0 : i32
    return %c0_i32, %c0_i32_0 : i32, i32
  }
  func.func @transform_4(%arg0: i32) -> (i32, i32) {
    %c0_i32 = arith.constant 0 : i32
    %c0_i32_0 = arith.constant 0 : i32
    %c0_i32_1 = arith.constant 0 : i32
    return %c0_i32, %c0_i32_0 : i32, i32
  }
  func.func @transform_5(%arg0: i32) -> (i32, i32) {
    %c0_i32 = arith.constant 0 : i32
    %c0_i32_0 = arith.constant 0 : i32
    %c0_i32_1 = arith.constant 0 : i32
    return %c0_i32, %c0_i32_0 : i32, i32
  }
  func.func @transform_6(%arg0: i32) -> (i32, i32) {
    %c0_i32 = arith.constant 0 : i32
    %c0_i32_0 = arith.constant 0 : i32
    %c0_i32_1 = arith.constant 0 : i32
    return %c0_i32, %c0_i32_0 : i32, i32
  }
  func.func @transform_7(%arg0: i32) -> (i32, i32) {
    %c0_i32 = arith.constant 0 : i32
    %c0_i32_0 = arith.constant 0 : i32
    %c0_i32_1 = arith.constant 0 : i32
    return %c0_i32, %c0_i32_0 : i32, i32
  }
  func.func @transform_8(%arg0: i32) -> (i32, i32) {
    %c0_i32 = arith.constant 0 : i32
    %c0_i32_0 = arith.constant 0 : i32
    %c0_i32_1 = arith.constant 0 : i32
    return %c0_i32, %c0_i32_0 : i32, i32
  }
  func.func @transform_9(%arg0: i32) -> (i32, i32) {
    %c0_i32 = arith.constant 0 : i32
    %c0_i32_0 = arith.constant 0 : i32
    %c0_i32_1 = arith.constant 0 : i32
    return %c0_i32, %c0_i32_0 : i32, i32
  }
  func.func @transform_10(%arg0: i32) -> (i32, i32) {
    %c0_i32 = arith.constant 0 : i32
    %c0_i32_0 = arith.constant 0 : i32
    %c0_i32_1 = arith.constant 0 : i32
    return %c0_i32, %c0_i32_0 : i32, i32
  }
  func.func @transform_11(%arg0: i32) -> (i32, i32) {
    %c0_i32 = arith.constant 0 : i32
    %c0_i32_0 = arith.constant 0 : i32
    %c0_i32_1 = arith.constant 0 : i32
    return %c0_i32, %c0_i32_0 : i32, i32
  }
  func.func @transform_12(%arg0: i32) -> (i32, i32, i32) {
    %c0_i32 = arith.constant 0 : i32
    %c0_i32_0 = arith.constant 0 : i32
    %c0_i32_1 = arith.constant 0 : i32
    return %arg0, %c0_i32, %c0_i32_0 : i32, i32, i32
  }
}

</mosaic_0001>

<llo_original>
// kernel: tac_forward.1
$region0: #{tac_forward.1}
  #allocation0 [shape = 'u32[]', space=smem, size = 0x4, offset = 0x4, fixed_abs, tag = 'smem constant byte address 0x4 - core index']
  #allocation1 [shape = 'u32[144,128]{1,0:T(1,128)}', space=vmem, size = 0x12000, scoped, tag = 'internal scratch']
  %s0 = inlined_call_operand.vmem [shape: f32[3], index: 0, kind: input, shape index: {}]
  %s1 = inlined_call_operand.vmem [shape: f32[2,8,128], index: 1, kind: input, shape index: {}]
  %s2 = inlined_call_operand.vmem [shape: bf16[128,128], index: 2, kind: input, shape index: {}]
  %s3 = inlined_call_operand.vmem [shape: f32[1,128], index: 3, kind: input, shape index: {}]
  %s4 = inlined_call_operand.vmem [shape: bf16[128,32], index: 4, kind: input, shape index: {}]
  %s5 = inlined_call_operand.vmem [shape: f32[1,32], index: 5, kind: input, shape index: {}]
  %s6 = inlined_call_operand.vmem [shape: bf16[128,128], index: 6, kind: input, shape index: {}]
  %s7 = inlined_call_operand.vmem [shape: bf16[32,128], index: 7, kind: input, shape index: {}]
  %s8 = inlined_call_operand.vmem [shape: f32[1,128], index: 8, kind: input, shape index: {}]
  %s9 = inlined_call_operand.vmem [shape: f32[128,4], index: 9, kind: input, shape index: {}]
  %s10 = inlined_call_operand.vmem [shape: f32[4,128], index: 10, kind: input, shape index: {}]
  %s11 = inlined_call_operand.vmem [shape: f32[2,128], index: 11, kind: input, shape index: {}]
  %s12 = inlined_call_operand.vmem [shape: f32[2,8,128], index: 12, kind: output, shape index: {}]
  %s13 = sld [smem:[#allocation0]]
  $region85: #{tac_forward.1} parent=0
    _
  %s15 = ssub.s32 1, %s13
  %s16 = scalar_select 0, %s15, %s13
  $region1: #{tac_forward.1} parent=0
    #allocation2 [shape = 'u8[512]{0}', space=smem, size = 0x200, scoped, tag = 'input window, operand 0, single buffered']
    #allocation3 [shape = 's32[2]{0}', space=sflag, size = 0x8, scoped, tag = 'scoped memory for tac_forward.1']
    %17 = vsyncpa [#allocation3], 0
    loop: start=0, step=1, limit=4
    $region2: #{tac_forward.1} parent=1 // loop_pre_header
      _
    $region3: #{tac_forward.1} parent=1 // loop_header
      %s19 = sphi 0, %s23
      %p20 = scmp.ge.s32.totalorder %s19, 4
      %s27 = sphi 0, %s27
      %s29 = sphi 0, %s27
      %s30 = sphi 0, %s29
      %s44 = sphi 0, %s30
      %s50 = sphi 0, %s52
      %s53 = sphi 0, %s50
      %s54 = sphi 0, %s53
      %s70 = sphi 0, %s54
      %s74 = sphi 0, %s74
      %s76 = sphi 0, %s74
      %s77 = sphi 0, %s76
      %s91 = sphi 0, %s77
      %s95 = sphi 0, %s95
      %s97 = sphi 0, %s95
      %s98 = sphi 0, %s97
      %s112 = sphi 0, %s98
      %s116 = sphi 0, %s116
      %s118 = sphi 0, %s116
      %s119 = sphi 0, %s118
      %s133 = sphi 0, %s119
      %s137 = sphi 0, %s137
      %s139 = sphi 0, %s137
      %s140 = sphi 0, %s139
      %s154 = sphi 0, %s140
      %s158 = sphi 0, %s158
      %s160 = sphi 0, %s158
      %s161 = sphi 0, %s160
      %s175 = sphi 0, %s161
      %s179 = sphi 0, %s179
      %s181 = sphi 0, %s179
      %s182 = sphi 0, %s181
      %s196 = sphi 0, %s182
      %s200 = sphi 0, %s200
      %s202 = sphi 0, %s200
      %s203 = sphi 0, %s202
      %s217 = sphi 0, %s203
      %s221 = sphi 0, %s221
      %s223 = sphi 0, %s221
      %s224 = sphi 0, %s223
      %s238 = sphi 0, %s224
      %s242 = sphi 0, %s242
      %s244 = sphi 0, %s242
      %s245 = sphi 0, %s244
      %s259 = sphi 0, %s245
      %s263 = sphi 0, %s263
      %s265 = sphi 0, %s263
      %s266 = sphi 0, %s265
      %s280 = sphi 0, %s266
      %s286 = sphi 0, %s288
      %s289 = sphi 0, %s286
      %s290 = sphi 0, %s289
      %s306 = sphi 0, %s290
    $region4: #{tac_forward.1} parent=1 // loop_header_branch
      %22 = sbr.rel (%p20) target = $region8
    $region5: #{tac_forward.1} parent=1 // loop_body
      %s24 = ssub.s32 %s19, 1
      %s25 = ssub.s32 %s19, 2
      %s26 = sadd.s32 %s19, 1
      %s28 = sadd.s32 %s27, 1
      %p31 = scmp.eq.s32.totalorder %s19, 1
      %p32 = scmp.ne.s32.totalorder %s27, %s29
      %p33 = scmp.eq.s32.totalorder %s19, 0
      %p34 = por %p32, %p33
      %p35 = scmp.ne.s32.totalorder %s27, %s29
      %p36 = scmp.eq.s32.totalorder %s24, 1
      %p37 = por %p35, %p36
      %p38 = scmp.ne.s32.totalorder %s29, %s30
      %p39 = scmp.eq.s32.totalorder %s24, 0
      %p40 = por %p38, %p39
      %p41 = scmp.ne.s32.totalorder %s29, %s30
      %p42 = scmp.eq.s32.totalorder %s25, 1
      %p43 = por %p41, %p42
      %p45 = scmp.ne.s32.totalorder %s30, %s44
      %p46 = scmp.eq.s32.totalorder %s25, 0
      %p47 = por %p45, %p46
      %s48 = ssub.s32 %s19, %s26
      %p49 = scmp.eq.s32.totalorder %s48, 0
      %s51 = sadd.s32 %s50, 1
      %s52 = scalar_select %p49, %s50, %s51
      %p55 = pneg %p49
      %p56 = scmp.eq.s32.totalorder %s19, 1
      %p57 = por %p55, %p56
      %p58 = scmp.ne.s32.totalorder %s50, %s53
      %p59 = scmp.eq.s32.totalorder %s19, 0
      %p60 = por %p58, %p59
      %p61 = scmp.ne.s32.totalorder %s50, %s53
      %p62 = scmp.eq.s32.totalorder %s24, 1
      %p63 = por %p61, %p62
      %p64 = scmp.ne.s32.totalorder %s53, %s54
      %p65 = scmp.eq.s32.totalorder %s24, 0
      %p66 = por %p64, %p65
      %p67 = scmp.ne.s32.totalorder %s53, %s54
      %p68 = scmp.eq.s32.totalorder %s25, 1
      %p69 = por %p67, %p68
      %p71 = scmp.ne.s32.totalorder %s54, %s70
      %p72 = scmp.eq.s32.totalorder %s25, 0
      %p73 = por %p71, %p72
      %s75 = sadd.s32 %s74, 1
      %p78 = scmp.eq.s32.totalorder %s19, 1
      %p79 = scmp.ne.s32.totalorder %s74, %s76
      %p80 = scmp.eq.s32.totalorder %s19, 0
      %p81 = por %p79, %p80
      %p82 = scmp.ne.s32.totalorder %s74, %s76
      %p83 = scmp.eq.s32.totalorder %s24, 1
      %p84 = por %p82, %p83
      %p85 = scmp.ne.s32.totalorder %s76, %s77
      %p86 = scmp.eq.s32.totalorder %s24, 0
      %p87 = por %p85, %p86
      %p88 = scmp.ne.s32.totalorder %s76, %s77
      %p89 = scmp.eq.s32.totalorder %s25, 1
      %p90 = por %p88, %p89
      %p92 = scmp.ne.s32.totalorder %s77, %s91
      %p93 = scmp.eq.s32.totalorder %s25, 0
      %p94 = por %p92, %p93
      %s96 = sadd.s32 %s95, 1
      %p99 = scmp.eq.s32.totalorder %s19, 1
      %p100 = scmp.ne.s32.totalorder %s95, %s97
      %p101 = scmp.eq.s32.totalorder %s19, 0
      %p102 = por %p100, %p101
      %p103 = scmp.ne.s32.totalorder %s95, %s97
      %p104 = scmp.eq.s32.totalorder %s24, 1
      %p105 = por %p103, %p104
      %p106 = scmp.ne.s32.totalorder %s97, %s98
      %p107 = scmp.eq.s32.totalorder %s24, 0
      %p108 = por %p106, %p107
      %p109 = scmp.ne.s32.totalorder %s97, %s98
      %p110 = scmp.eq.s32.totalorder %s25, 1
      %p111 = por %p109, %p110
      %p113 = scmp.ne.s32.totalorder %s98, %s112
      %p114 = scmp.eq.s32.totalorder %s25, 0
      %p115 = por %p113, %p114
      %s117 = sadd.s32 %s116, 1
      %p120 = scmp.eq.s32.totalorder %s19, 1
      %p121 = scmp.ne.s32.totalorder %s116, %s118
      %p122 = scmp.eq.s32.totalorder %s19, 0
      %p123 = por %p121, %p122
      %p124 = scmp.ne.s32.totalorder %s116, %s118
      %p125 = scmp.eq.s32.totalorder %s24, 1
      %p126 = por %p124, %p125
      %p127 = scmp.ne.s32.totalorder %s118, %s119
      %p128 = scmp.eq.s32.totalorder %s24, 0
      %p129 = por %p127, %p128
      %p130 = scmp.ne.s32.totalorder %s118, %s119
      %p131 = scmp.eq.s32.totalorder %s25, 1
      %p132 = por %p130, %p131
      %p134 = scmp.ne.s32.totalorder %s119, %s133
      %p135 = scmp.eq.s32.totalorder %s25, 0
      %p136 = por %p134, %p135
      %s138 = sadd.s32 %s137, 1
      %p141 = scmp.eq.s32.totalorder %s19, 1
      %p142 = scmp.ne.s32.totalorder %s137, %s139
      %p143 = scmp.eq.s32.totalorder %s19, 0
      %p144 = por %p142, %p143
      %p145 = scmp.ne.s32.totalorder %s137, %s139
      %p146 = scmp.eq.s32.totalorder %s24, 1
      %p147 = por %p145, %p146
      %p148 = scmp.ne.s32.totalorder %s139, %s140
      %p149 = scmp.eq.s32.totalorder %s24, 0
      %p150 = por %p148, %p149
      %p151 = scmp.ne.s32.totalorder %s139, %s140
      %p152 = scmp.eq.s32.totalorder %s25, 1
      %p153 = por %p151, %p152
      %p155 = scmp.ne.s32.totalorder %s140, %s154
      %p156 = scmp.eq.s32.totalorder %s25, 0
      %p157 = por %p155, %p156
      %s159 = sadd.s32 %s158, 1
      %p162 = scmp.eq.s32.totalorder %s19, 1
      %p163 = scmp.ne.s32.totalorder %s158, %s160
      %p164 = scmp.eq.s32.totalorder %s19, 0
      %p165 = por %p163, %p164
      %p166 = scmp.ne.s32.totalorder %s158, %s160
      %p167 = scmp.eq.s32.totalorder %s24, 1
      %p168 = por %p166, %p167
      %p169 = scmp.ne.s32.totalorder %s160, %s161
      %p170 = scmp.eq.s32.totalorder %s24, 0
      %p171 = por %p169, %p170
      %p172 = scmp.ne.s32.totalorder %s160, %s161
      %p173 = scmp.eq.s32.totalorder %s25, 1
      %p174 = por %p172, %p173
      %p176 = scmp.ne.s32.totalorder %s161, %s175
      %p177 = scmp.eq.s32.totalorder %s25, 0
      %p178 = por %p176, %p177
      %s180 = sadd.s32 %s179, 1
      %p183 = scmp.eq.s32.totalorder %s19, 1
      %p184 = scmp.ne.s32.totalorder %s179, %s181
      %p185 = scmp.eq.s32.totalorder %s19, 0
      %p186 = por %p184, %p185
      %p187 = scmp.ne.s32.totalorder %s179, %s181
      %p188 = scmp.eq.s32.totalorder %s24, 1
      %p189 = por %p187, %p188
      %p190 = scmp.ne.s32.totalorder %s181, %s182
      %p191 = scmp.eq.s32.totalorder %s24, 0
      %p192 = por %p190, %p191
      %p193 = scmp.ne.s32.totalorder %s181, %s182
      %p194 = scmp.eq.s32.totalorder %s25, 1
      %p195 = por %p193, %p194
      %p197 = scmp.ne.s32.totalorder %s182, %s196
      %p198 = scmp.eq.s32.totalorder %s25, 0
      %p199 = por %p197, %p198
      %s201 = sadd.s32 %s200, 1
      %p204 = scmp.eq.s32.totalorder %s19, 1
      %p205 = scmp.ne.s32.totalorder %s200, %s202
      %p206 = scmp.eq.s32.totalorder %s19, 0
      %p207 = por %p205, %p206
      %p208 = scmp.ne.s32.totalorder %s200, %s202
      %p209 = scmp.eq.s32.totalorder %s24, 1
      %p210 = por %p208, %p209
      %p211 = scmp.ne.s32.totalorder %s202, %s203
      %p212 = scmp.eq.s32.totalorder %s24, 0
      %p213 = por %p211, %p212
      %p214 = scmp.ne.s32.totalorder %s202, %s203
      %p215 = scmp.eq.s32.totalorder %s25, 1
      %p216 = por %p214, %p215
      %p218 = scmp.ne.s32.totalorder %s203, %s217
      %p219 = scmp.eq.s32.totalorder %s25, 0
      %p220 = por %p218, %p219
      %s222 = sadd.s32 %s221, 1
      %p225 = scmp.eq.s32.totalorder %s19, 1
      %p226 = scmp.ne.s32.totalorder %s221, %s223
      %p227 = scmp.eq.s32.totalorder %s19, 0
      %p228 = por %p226, %p227
      %p229 = scmp.ne.s32.totalorder %s221, %s223
      %p230 = scmp.eq.s32.totalorder %s24, 1
      %p231 = por %p229, %p230
      %p232 = scmp.ne.s32.totalorder %s223, %s224
      %p233 = scmp.eq.s32.totalorder %s24, 0
      %p234 = por %p232, %p233
      %p235 = scmp.ne.s32.totalorder %s223, %s224
      %p236 = scmp.eq.s32.totalorder %s25, 1
      %p237 = por %p235, %p236
      %p239 = scmp.ne.s32.totalorder %s224, %s238
      %p240 = scmp.eq.s32.totalorder %s25, 0
      %p241 = por %p239, %p240
      %s243 = sadd.s32 %s242, 1
      %p246 = scmp.eq.s32.totalorder %s19, 1
      %p247 = scmp.ne.s32.totalorder %s242, %s244
      %p248 = scmp.eq.s32.totalorder %s19, 0
      %p249 = por %p247, %p248
      %p250 = scmp.ne.s32.totalorder %s242, %s244
      %p251 = scmp.eq.s32.totalorder %s24, 1
      %p252 = por %p250, %p251
      %p253 = scmp.ne.s32.totalorder %s244, %s245
      %p254 = scmp.eq.s32.totalorder %s24, 0
      %p255 = por %p253, %p254
      %p256 = scmp.ne.s32.totalorder %s244, %s245
      %p257 = scmp.eq.s32.totalorder %s25, 1
      %p258 = por %p256, %p257
      %p260 = scmp.ne.s32.totalorder %s245, %s259
      %p261 = scmp.eq.s32.totalorder %s25, 0
      %p262 = por %p260, %p261
      %s264 = sadd.s32 %s263, 1
      %p267 = scmp.eq.s32.totalorder %s19, 1
      %p268 = scmp.ne.s32.totalorder %s263, %s265
      %p269 = scmp.eq.s32.totalorder %s19, 0
      %p270 = por %p268, %p269
      %p271 = scmp.ne.s32.totalorder %s263, %s265
      %p272 = scmp.eq.s32.totalorder %s24, 1
      %p273 = por %p271, %p272
      %p274 = scmp.ne.s32.totalorder %s265, %s266
      %p275 = scmp.eq.s32.totalorder %s24, 0
      %p276 = por %p274, %p275
      %p277 = scmp.ne.s32.totalorder %s265, %s266
      %p278 = scmp.eq.s32.totalorder %s25, 1
      %p279 = por %p277, %p278
      %p281 = scmp.ne.s32.totalorder %s266, %s280
      %p282 = scmp.eq.s32.totalorder %s25, 0
      %p283 = por %p281, %p282
      %s284 = ssub.s32 %s19, %s26
      %p285 = scmp.eq.s32.totalorder %s284, 0
      %s287 = sadd.s32 %s286, 1
      %s288 = scalar_select %p285, %s286, %s287
      %p291 = pneg %p285
      %p292 = scmp.eq.s32.totalorder %s19, 1
      %p293 = por %p291, %p292
      %p294 = scmp.ne.s32.totalorder %s286, %s289
      %p295 = scmp.eq.s32.totalorder %s19, 0
      %p296 = por %p294, %p295
      %p297 = scmp.ne.s32.totalorder %s286, %s289
      %p298 = scmp.eq.s32.totalorder %s24, 1
      %p299 = por %p297, %p298
      %p300 = scmp.ne.s32.totalorder %s289, %s290
      %p301 = scmp.eq.s32.totalorder %s24, 0
      %p302 = por %p300, %p301
      %p303 = scmp.ne.s32.totalorder %s289, %s290
      %p304 = scmp.eq.s32.totalorder %s25, 1
      %p305 = por %p303, %p304
      %p307 = scmp.ne.s32.totalorder %s290, %s306
      %p308 = scmp.eq.s32.totalorder %s25, 0
      %p309 = por %p307, %p308
      %p310 = scmp.le.s32.totalorder 1, %s19
      %p311 = scmp.lt.s32.totalorder %s19, 3
      %p312 = pnand %p310, %p311
      %p313 = pneg %p312
      // Predicated region
      $region9: #{tac_forward.1} parent=5 // pred_check
        _
      $region10: #{tac_forward.1} parent=5 // pred_check_branch
        %315 = sbr.rel (%p312) target = $region12
      $region11: #{tac_forward.1} parent=5 // pred_region
        %s316 = ssub.s32 %s19, 1
        // Predicated region
        $region13: #{tac_forward.1} parent=11 // pred_check
          %p317 = pneg %p40
        $region14: #{tac_forward.1} parent=11 // pred_check_branch
          %319 = sbr.rel (%p317) target = $region16
        $region15: #{tac_forward.1} parent=11 // pred_region
          %s321 = ssub.s32 16, 16
          %322 = vsyncadd [#allocation3], %s321
          %s324 = sshll.u32 %s0, 4
          %s325 = int_to_ptr.vmem [resolvable:$true] %s324
          %327 = dma.vmem_to_smem %s325, 16, [#allocation2], [#allocation3]
        $region16: #{tac_forward.1} parent=11 // pred_fallthru
          _
        // Predicated region
        $region17: #{tac_forward.1} parent=11 // pred_check
          %p328 = pneg %p87
        $region18: #{tac_forward.1} parent=11 // pred_check_branch
          %330 = sbr.rel (%p328) target = $region20
        $region19: #{tac_forward.1} parent=11 // pred_region
          _
        $region20: #{tac_forward.1} parent=11 // pred_fallthru
          _
        // Predicated region
        $region21: #{tac_forward.1} parent=11 // pred_check
          %p331 = pneg %p108
        $region22: #{tac_forward.1} parent=11 // pred_check_branch
          %333 = sbr.rel (%p331) target = $region24
        $region23: #{tac_forward.1} parent=11 // pred_region
          _
        $region24: #{tac_forward.1} parent=11 // pred_fallthru
          _
        // Predicated region
        $region25: #{tac_forward.1} parent=11 // pred_check
          %p334 = pneg %p129
        $region26: #{tac_forward.1} parent=11 // pred_check_branch
          %336 = sbr.rel (%p334) target = $region28
        $region27: #{tac_forward.1} parent=11 // pred_region
          _
        $region28: #{tac_forward.1} parent=11 // pred_fallthru
          _
        // Predicated region
        $region29: #{tac_forward.1} parent=11 // pred_check
          %p337 = pneg %p150
        $region30: #{tac_forward.1} parent=11 // pred_check_branch
          %339 = sbr.rel (%p337) target = $region32
        $region31: #{tac_forward.1} parent=11 // pred_region
          _
        $region32: #{tac_forward.1} parent=11 // pred_fallthru
          _
        // Predicated region
        $region33: #{tac_forward.1} parent=11 // pred_check
          %p340 = pneg %p171
        $region34: #{tac_forward.1} parent=11 // pred_check_branch
          %342 = sbr.rel (%p340) target = $region36
        $region35: #{tac_forward.1} parent=11 // pred_region
          _
        $region36: #{tac_forward.1} parent=11 // pred_fallthru
          _
        // Predicated region
        $region37: #{tac_forward.1} parent=11 // pred_check
          %p343 = pneg %p192
        $region38: #{tac_forward.1} parent=11 // pred_check_branch
          %345 = sbr.rel (%p343) target = $region40
        $region39: #{tac_forward.1} parent=11 // pred_region
          _
        $region40: #{tac_forward.1} parent=11 // pred_fallthru
          _
        // Predicated region
        $region41: #{tac_forward.1} parent=11 // pred_check
          %p346 = pneg %p213
        $region42: #{tac_forward.1} parent=11 // pred_check_branch
          %348 = sbr.rel (%p346) target = $region44
        $region43: #{tac_forward.1} parent=11 // pred_region
          _
        $region44: #{tac_forward.1} parent=11 // pred_fallthru
          _
        // Predicated region
        $region45: #{tac_forward.1} parent=11 // pred_check
          %p349 = pneg %p234
        $region46: #{tac_forward.1} parent=11 // pred_check_branch
          %351 = sbr.rel (%p349) target = $region48
        $region47: #{tac_forward.1} parent=11 // pred_region
          _
        $region48: #{tac_forward.1} parent=11 // pred_fallthru
          _
        // Predicated region
        $region49: #{tac_forward.1} parent=11 // pred_check
          %p352 = pneg %p255
        $region50: #{tac_forward.1} parent=11 // pred_check_branch
          %354 = sbr.rel (%p352) target = $region52
        $region51: #{tac_forward.1} parent=11 // pred_region
          _
        $region52: #{tac_forward.1} parent=11 // pred_fallthru
          _
        // Predicated region
        $region53: #{tac_forward.1} parent=11 // pred_check
          %p355 = pneg %p276
        $region54: #{tac_forward.1} parent=11 // pred_check_branch
          %357 = sbr.rel (%p355) target = $region56
        $region55: #{tac_forward.1} parent=11 // pred_region
          _
        $region56: #{tac_forward.1} parent=11 // pred_fallthru
          _
      $region12: #{tac_forward.1} parent=5 // pred_fallthru
        _
      %p358 = scmp.lt.s32.totalorder %s19, 2
      // Predicated region
      $region57: #{tac_forward.1} parent=5 // pred_check
        %p359 = pneg %p358
      $region58: #{tac_forward.1} parent=5 // pred_check_branch
        %361 = sbr.rel (%p359) target = $region60
      $region59: #{tac_forward.1} parent=5 // pred_region
        // Predicated region
        $region61: #{tac_forward.1} parent=59 // pred_check
          %p362 = pneg %p60
        $region62: #{tac_forward.1} parent=59 // pred_check_branch
          %364 = sbr.rel (%p362) target = $region64
        $region63: #{tac_forward.1} parent=59 // pred_region
          %p365 = scmp.lt.s32.totalorder %s19, 1
          %s366 = scalar_select %p365, %s19, 1
          %s367 = smul.addr %s366, 8
          %s368 = scalar_lea.vmem %s1, %s367
        $region64: #{tac_forward.1} parent=59 // pred_fallthru
          _
      $region60: #{tac_forward.1} parent=5 // pred_fallthru
        _
      %p369 = scmp.le.s32.totalorder 1, %s19
      %p370 = scmp.lt.s32.totalorder %s19, 3
      %p371 = pnand %p369, %p370
      %p372 = pneg %p371
      // Predicated region
      $region65: #{tac_forward.1} parent=5 // pred_check
        _
      $region66: #{tac_forward.1} parent=5 // pred_check_branch
        %374 = sbr.rel (%p371) target = $region68
      $region67: #{tac_forward.1} parent=5 // pred_region
        %s375 = ssub.s32 %s19, 1
        // Predicated region
        $region69: #{tac_forward.1} parent=67 // pred_check
          %p376 = pneg %p40
        $region70: #{tac_forward.1} parent=67 // pred_check_branch
          %378 = sbr.rel (%p376) target = $region72
        $region71: #{tac_forward.1} parent=67 // pred_region
          %379 = dma.done [#allocation3], 16
        $region72: #{tac_forward.1} parent=67 // pred_fallthru
          _
        %380 = sfence
        %p381 = pneg %p40
        %p382 = pneg %p37
        %p383 = scmp.lt.s32.totalorder %s24, 1
        %s384 = scalar_select %p383, %s24, 1
        %s385 = smul.addr %s384, 8
        %s386 = scalar_lea.vmem %s1, %s385
        %p387 = pneg %p66
        %p388 = pneg %p63
        %p389 = pneg %p87
        %p390 = pneg %p84
        %p391 = pneg %p108
        %p392 = pneg %p105
        %p393 = pneg %p129
        %p394 = pneg %p126
        %p395 = pneg %p150
        %p396 = pneg %p147
        %p397 = pneg %p171
        %p398 = pneg %p168
        %p399 = pneg %p192
        %p400 = pneg %p189
        %p401 = pneg %p213
        %p402 = pneg %p210
        %p403 = pneg %p234
        %p404 = pneg %p231
        %p405 = pneg %p255
        %p406 = pneg %p252
        %p407 = pneg %p276
        %p408 = pneg %p273
        %p409 = pneg %p302
        %p410 = pneg %p299
        %p411 = scmp.lt.s32.totalorder %s24, 1
        %s412 = scalar_select %p411, %s24, 1
        %s413 = smul.addr %s412, 8
        %s414 = scalar_lea.vmem %s12, %s413
        %p415 = scmp.lt.s32.totalorder %s24, 1
        %s416 = scalar_select %p415, %s24, 1
        %s417 = smul.addr %s416, 8
        %s418 = scalar_lea.vmem %s1, %s417
        %p419 = scmp.lt.s32.totalorder %s24, 1
        %s420 = scalar_select %p419, %s24, 1
        %s421 = smul.addr %s420, 8
        %s422 = scalar_lea.vmem %s12, %s421
        %s424 = sld [smem:[#allocation2]]
        %s425 = sld [smem:[#allocation2 + $0x1]]
        %s426 = sld [smem:[#allocation2 + $0x2]]
        %v427 = vld [vmem:[%s418] sm:$0xff]
        %v428 = vpack.c.bf16 %v427, %v427
        %v429 = vld [vmem:[%s2] sm:$0xf]
        %v430 = vld [vmem:[%s2 + $0x4] sm:$0xf]
        %v431 = vld [vmem:[%s2 + $0x8] sm:$0xf]
        %v432 = vld [vmem:[%s2 + $0xc] sm:$0xf]
        %v433 = vld [vmem:[%s2 + $0x10] sm:$0xf]
        %v434 = vld [vmem:[%s2 + $0x14] sm:$0xf]
        %v435 = vld [vmem:[%s2 + $0x18] sm:$0xf]
        %v436 = vld [vmem:[%s2 + $0x1c] sm:$0xf]
        %v437 = vld [vmem:[%s2 + $0x20] sm:$0xf]
        %v438 = vld [vmem:[%s2 + $0x24] sm:$0xf]
        %v439 = vld [vmem:[%s2 + $0x28] sm:$0xf]
        %v440 = vld [vmem:[%s2 + $0x2c] sm:$0xf]
        %v441 = vld [vmem:[%s2 + $0x30] sm:$0xf]
        %v442 = vld [vmem:[%s2 + $0x34] sm:$0xf]
        %v443 = vld [vmem:[%s2 + $0x38] sm:$0xf]
        %v444 = vld [vmem:[%s2 + $0x3c] sm:$0xf]
        %v445 = vld [vmem:[%s3] sm:$0x1]
        %v447 = vlaneseq
        %v448 = vshrl.u32 %v447, 7
        %v449 = vsub.s32 0, %v448
        %v450 = vrot.slane %v445, %v449
        %v468 = vunpack.c.l.b16 %v429
        %v469 = vunpack.c.l.b16 %v430
        %v470 = vunpack.c.l.b16 %v431
        %v471 = vunpack.c.l.b16 %v432
        %v472 = vunpack.c.l.b16 %v433
        %v473 = vunpack.c.l.b16 %v434
        %v474 = vunpack.c.l.b16 %v435
        %v475 = vunpack.c.l.b16 %v436
        %v476 = vunpack.c.l.b16 %v437
        %v477 = vunpack.c.l.b16 %v438
        %v478 = vunpack.c.l.b16 %v439
        %v479 = vunpack.c.l.b16 %v440
        %v480 = vunpack.c.l.b16 %v441
        %v481 = vunpack.c.l.b16 %v442
        %v482 = vunpack.c.l.b16 %v443
        %v483 = vunpack.c.l.b16 %v444
        %v484 = vpack.c.b16 %v469, %v468
        %v485 = vpack.c.b16 %v471, %v470
        %v486 = vpack.c.b16 %v473, %v472
        %v487 = vpack.c.b16 %v475, %v474
        %v488 = vpack.c.b16 %v477, %v476
        %v489 = vpack.c.b16 %v479, %v478
        %v490 = vpack.c.b16 %v481, %v480
        %v491 = vpack.c.b16 %v483, %v482
        %500 = vmatprep.subr.bf16.mxu0 0
        %501 = vmatpush1.bf16.msra.mxu0 %v484
        %502 = vmatprep.subr.bf16.mxu0 0
        %503 = vmatpush1.bf16.msra.mxu0 %v485
        %504 = vmatprep.subr.bf16.mxu0 0
        %505 = vmatpush1.bf16.msra.mxu0 %v486
        %506 = vmatprep.subr.bf16.mxu0 0
        %507 = vmatpush1.bf16.msra.mxu0 %v487
        %508 = vmatprep.subr.bf16.mxu0 0
        %509 = vmatpush1.bf16.msra.mxu0 %v488
        %510 = vmatprep.subr.bf16.mxu0 0
        %511 = vmatpush1.bf16.msra.mxu0 %v489
        %512 = vmatprep.subr.bf16.mxu0 0
        %513 = vmatpush1.bf16.msra.mxu0 %v490
        %514 = vmatprep.subr.bf16.mxu0 0
        %515 = vmatpush1.bf16.msra.mxu0 %v491
        %516 = vmatprep.subr.bf16.mxu0 0
        %517 = vmatpush1.bf16.msra.mxu0 0
        %518 = vmatprep.subr.bf16.mxu0 0
        %519 = vmatpush1.bf16.msra.mxu0 0
        %520 = vmatprep.subr.bf16.mxu0 0
        %521 = vmatpush1.bf16.msra.mxu0 0
        %522 = vmatprep.subr.bf16.mxu0 0
        %523 = vmatpush1.bf16.msra.mxu0 0
        %524 = vmatprep.subr.bf16.mxu0 0
        %525 = vmatpush1.bf16.msra.mxu0 0
        %526 = vmatprep.subr.bf16.mxu0 0
        %527 = vmatpush1.bf16.msra.mxu0 0
        %528 = vmatprep.subr.bf16.mxu0 0
        %529 = vmatpush1.bf16.msra.mxu0 0
        %530 = vmatprep.subr.bf16.mxu0 0
        %531 = vmatpush1.bf16.msra.mxu0 0
        %532 = vmatprep.mubr.bf16.mxu0 0
        %533 = vmatmul.mubr.bf16.gmra.mrb[0].mxu0 %v428
        %v534 = vpop.f32.mrb[0].mxu0
        %v535 = vadd.f32 %v450, %v534
        %v536 = vpop.f32.mrb[0].mxu0
        %v537 = vpop.f32.mrb[0].mxu0
        %v538 = vpop.f32.mrb[0].mxu0
        %539 = vdwg.mxu0
        %vm540 = vcmp.ge.f32.partialorder %v535, 0.0
        %v541 = vstv %s424
        %v542 = vmul.f32 %v541, %v535
        %v543 = vsel %vm540, %v535, %v542
        %v544 = vpack.c.bf16 %v543, %v543
        %v545 = vld [vmem:[%s4] sm:$0xf]
        %v546 = vld [vmem:[%s4 + $0x4] sm:$0xf]
        %v547 = vld [vmem:[%s4 + $0x8] sm:$0xf]
        %v548 = vld [vmem:[%s4 + $0xc] sm:$0xf]
        %v549 = vld [vmem:[%s4 + $0x10] sm:$0xf]
        %v550 = vld [vmem:[%s4 + $0x14] sm:$0xf]
        %v551 = vld [vmem:[%s4 + $0x18] sm:$0xf]
        %v552 = vld [vmem:[%s4 + $0x1c] sm:$0xf]
        %v553 = vld [vmem:[%s4 + $0x20] sm:$0xf]
        %v554 = vld [vmem:[%s4 + $0x24] sm:$0xf]
        %v555 = vld [vmem:[%s4 + $0x28] sm:$0xf]
        %v556 = vld [vmem:[%s4 + $0x2c] sm:$0xf]
        %v557 = vld [vmem:[%s4 + $0x30] sm:$0xf]
        %v558 = vld [vmem:[%s4 + $0x34] sm:$0xf]
        %v559 = vld [vmem:[%s4 + $0x38] sm:$0xf]
        %v560 = vld [vmem:[%s4 + $0x3c] sm:$0xf]
        %v561 = vld [vmem:[%s5] sm:$0x1]
        %v563 = vlaneseq
        %v564 = vshrl.u32 %v563, 7
        %v565 = vsub.s32 0, %v564
        %v566 = vrot.slane %v561, %v565
        %v584 = vunpack.c.l.b16 %v545
        %v585 = vunpack.c.l.b16 %v546
        %v586 = vunpack.c.l.b16 %v547
        %v587 = vunpack.c.l.b16 %v548
        %v588 = vunpack.c.l.b16 %v549
        %v589 = vunpack.c.l.b16 %v550
        %v590 = vunpack.c.l.b16 %v551
        %v591 = vunpack.c.l.b16 %v552
        %v592 = vunpack.c.l.b16 %v553
        %v593 = vunpack.c.l.b16 %v554
        %v594 = vunpack.c.l.b16 %v555
        %v595 = vunpack.c.l.b16 %v556
        %v596 = vunpack.c.l.b16 %v557
        %v597 = vunpack.c.l.b16 %v558
        %v598 = vunpack.c.l.b16 %v559
        %v599 = vunpack.c.l.b16 %v560
        %v600 = vpack.c.b16 %v585, %v584
        %v601 = vpack.c.b16 %v587, %v586
        %v602 = vpack.c.b16 %v589, %v588
        %v603 = vpack.c.b16 %v591, %v590
        %v604 = vpack.c.b16 %v593, %v592
        %v605 = vpack.c.b16 %v595, %v594
        %v606 = vpack.c.b16 %v597, %v596
        %v607 = vpack.c.b16 %v599, %v598
        %616 = vmatprep.subr.bf16.mxu0 0
        %617 = vmatpush1.bf16.msra.mxu0 %v600
        %618 = vmatprep.subr.bf16.mxu0 0
        %619 = vmatpush1.bf16.msra.mxu0 %v601
        %620 = vmatprep.subr.bf16.mxu0 0
        %621 = vmatpush1.bf16.msra.mxu0 %v602
        %622 = vmatprep.subr.bf16.mxu0 0
        %623 = vmatpush1.bf16.msra.mxu0 %v603
        %624 = vmatprep.subr.bf16.mxu0 0
        %625 = vmatpush1.bf16.msra.mxu0 %v604
        %626 = vmatprep.subr.bf16.mxu0 0
        %627 = vmatpush1.bf16.msra.mxu0 %v605
        %628 = vmatprep.subr.bf16.mxu0 0
        %629 = vmatpush1.bf16.msra.mxu0 %v606
        %630 = vmatprep.subr.bf16.mxu0 0
        %631 = vmatpush1.bf16.msra.mxu0 %v607
        %632 = vmatprep.subr.bf16.mxu0 0
        %633 = vmatpush1.bf16.msra.mxu0 0
        %634 = vmatprep.subr.bf16.mxu0 0
        %635 = vmatpush1.bf16.msra.mxu0 0
        %636 = vmatprep.subr.bf16.mxu0 0
        %637 = vmatpush1.bf16.msra.mxu0 0
        %638 = vmatprep.subr.bf16.mxu0 0
        %639 = vmatpush1.bf16.msra.mxu0 0
        %640 = vmatprep.subr.bf16.mxu0 0
        %641 = vmatpush1.bf16.msra.mxu0 0
        %642 = vmatprep.subr.bf16.mxu0 0
        %643 = vmatpush1.bf16.msra.mxu0 0
        %644 = vmatprep.subr.bf16.mxu0 0
        %645 = vmatpush1.bf16.msra.mxu0 0
        %646 = vmatprep.subr.bf16.mxu0 0
        %647 = vmatpush1.bf16.msra.mxu0 0
        %648 = vmatprep.mubr.bf16.mxu0 0
        %649 = vmatmul.mubr.bf16.gmra.mrb[0].mxu0 %v544
        %v650 = vpop.f32.mrb[0].mxu0
        %v651 = vadd.f32 %v566, %v650
        %v652 = vpop.f32.mrb[0].mxu0
        %v653 = vpop.f32.mrb[0].mxu0
        %v654 = vpop.f32.mrb[0].mxu0
        %655 = vdwg.mxu0
        %vm656 = vcmp.ge.f32.partialorder %v651, 0.0
        %v657 = vstv %s425
        %v658 = vmul.f32 %v657, %v651
        %v659 = vsel %vm656, %v651, %v658
        %v660 = vld [vmem:[%s6] sm:$0xf]
        %v661 = vld [vmem:[%s6 + $0x4] sm:$0xf]
        %v662 = vld [vmem:[%s6 + $0x8] sm:$0xf]
        %v663 = vld [vmem:[%s6 + $0xc] sm:$0xf]
        %v664 = vld [vmem:[%s6 + $0x10] sm:$0xf]
        %v665 = vld [vmem:[%s6 + $0x14] sm:$0xf]
        %v666 = vld [vmem:[%s6 + $0x18] sm:$0xf]
        %v667 = vld [vmem:[%s6 + $0x1c] sm:$0xf]
        %v668 = vld [vmem:[%s6 + $0x20] sm:$0xf]
        %v669 = vld [vmem:[%s6 + $0x24] sm:$0xf]
        %v670 = vld [vmem:[%s6 + $0x28] sm:$0xf]
        %v671 = vld [vmem:[%s6 + $0x2c] sm:$0xf]
        %v672 = vld [vmem:[%s6 + $0x30] sm:$0xf]
        %v673 = vld [vmem:[%s6 + $0x34] sm:$0xf]
        %v674 = vld [vmem:[%s6 + $0x38] sm:$0xf]
        %v675 = vld [vmem:[%s6 + $0x3c] sm:$0xf]
        %v676 = vpack.c.bf16 %v659, %v659
        %v677 = vld [vmem:[%s7] sm:$0xf]
        %v678 = vld [vmem:[%s7 + $0x4] sm:$0xf]
        %v679 = vld [vmem:[%s7 + $0x8] sm:$0xf]
        %v680 = vld [vmem:[%s7 + $0xc] sm:$0xf]
        %v685 = vunpack.c.l.b16 %v677
        %v686 = vunpack.c.l.b16 %v678
        %v687 = vunpack.c.l.b16 %v679
        %v688 = vunpack.c.l.b16 %v680
        %v689 = vpack.c.b16 %v686, %v685
        %v690 = vpack.c.b16 %v688, %v687
        %vm693 = vcmask 261120
        %v695 = vsel %vm693, %v676, 0
        %697 = vmatprep.subr.bf16.mxu0 0
        %698 = vmatpush1.bf16.msra.mxu0 %v689
        %699 = vmatprep.subr.bf16.mxu0 0
        %700 = vmatpush1.bf16.msra.mxu0 %v690
        %701 = vmatprep.subr.bf16.mxu0 0
        %702 = vmatpush1.bf16.msra.mxu0 0
        %703 = vmatprep.subr.bf16.mxu0 0
        %704 = vmatpush1.bf16.msra.mxu0 0
        %705 = vmatprep.subr.bf16.mxu0 0
        %706 = vmatpush1.bf16.msra.mxu0 0
        %707 = vmatprep.subr.bf16.mxu0 0
        %708 = vmatpush1.bf16.msra.mxu0 0
        %709 = vmatprep.subr.bf16.mxu0 0
        %710 = vmatpush1.bf16.msra.mxu0 0
        %711 = vmatprep.subr.bf16.mxu0 0
        %712 = vmatpush1.bf16.msra.mxu0 0
        %713 = vmatprep.subr.bf16.mxu0 0
        %714 = vmatpush1.bf16.msra.mxu0 0
        %715 = vmatprep.subr.bf16.mxu0 0
        %716 = vmatpush1.bf16.msra.mxu0 0
        %717 = vmatprep.subr.bf16.mxu0 0
        %718 = vmatpush1.bf16.msra.mxu0 0
        %719 = vmatprep.subr.bf16.mxu0 0
        %720 = vmatpush1.bf16.msra.mxu0 0
        %721 = vmatprep.subr.bf16.mxu0 0
        %722 = vmatpush1.bf16.msra.mxu0 0
        %723 = vmatprep.subr.bf16.mxu0 0
        %724 = vmatpush1.bf16.msra.mxu0 0
        %725 = vmatprep.subr.bf16.mxu0 0
        %726 = vmatpush1.bf16.msra.mxu0 0
        %727 = vmatprep.subr.bf16.mxu0 0
        %728 = vmatpush1.bf16.msra.mxu0 0
        %729 = vmatprep.mubr.bf16.mxu0 0
        %730 = vmatmul.mubr.bf16.gmra.mrb[0].mxu0 %v695
        %v731 = vpop.f32.mrb[0].mxu0
        %v732 = vadd.f32 0.0, %v731
        %v733 = vpop.f32.mrb[0].mxu0
        %v734 = vpop.f32.mrb[0].mxu0
        %v735 = vpop.f32.mrb[0].mxu0
        %736 = vdwg.mxu0
        %v753 = vunpack.c.l.b16 %v660
        %v754 = vunpack.c.l.b16 %v661
        %v755 = vunpack.c.l.b16 %v662
        %v756 = vunpack.c.l.b16 %v663
        %v757 = vunpack.c.l.b16 %v664
        %v758 = vunpack.c.l.b16 %v665
        %v759 = vunpack.c.l.b16 %v666
        %v760 = vunpack.c.l.b16 %v667
        %v761 = vunpack.c.l.b16 %v668
        %v762 = vunpack.c.l.b16 %v669
        %v763 = vunpack.c.l.b16 %v670
        %v764 = vunpack.c.l.b16 %v671
        %v765 = vunpack.c.l.b16 %v672
        %v766 = vunpack.c.l.b16 %v673
        %v767 = vunpack.c.l.b16 %v674
        %v768 = vunpack.c.l.b16 %v675
        %v769 = vpack.c.b16 %v754, %v753
        %v770 = vpack.c.b16 %v756, %v755
        %v771 = vpack.c.b16 %v758, %v757
        %v772 = vpack.c.b16 %v760, %v759
        %v773 = vpack.c.b16 %v762, %v761
        %v774 = vpack.c.b16 %v764, %v763
        %v775 = vpack.c.b16 %v766, %v765
        %v776 = vpack.c.b16 %v768, %v767
        %785 = vmatprep.subr.bf16.mxu0 0
        %786 = vmatpush1.bf16.msra.mxu0 %v769
        %787 = vmatprep.subr.bf16.mxu0 0
        %788 = vmatpush1.bf16.msra.mxu0 %v770
        %789 = vmatprep.subr.bf16.mxu0 0
        %790 = vmatpush1.bf16.msra.mxu0 %v771
        %791 = vmatprep.subr.bf16.mxu0 0
        %792 = vmatpush1.bf16.msra.mxu0 %v772
        %793 = vmatprep.subr.bf16.mxu0 0
        %794 = vmatpush1.bf16.msra.mxu0 %v773
        %795 = vmatprep.subr.bf16.mxu0 0
        %796 = vmatpush1.bf16.msra.mxu0 %v774
        %797 = vmatprep.subr.bf16.mxu0 0
        %798 = vmatpush1.bf16.msra.mxu0 %v775
        %799 = vmatprep.subr.bf16.mxu0 0
        %800 = vmatpush1.bf16.msra.mxu0 %v776
        %801 = vmatprep.subr.bf16.mxu0 0
        %802 = vmatpush1.bf16.msra.mxu0 0
        %803 = vmatprep.subr.bf16.mxu0 0
        %804 = vmatpush1.bf16.msra.mxu0 0
        %805 = vmatprep.subr.bf16.mxu0 0
        %806 = vmatpush1.bf16.msra.mxu0 0
        %807 = vmatprep.subr.bf16.mxu0 0
        %808 = vmatpush1.bf16.msra.mxu0 0
        %809 = vmatprep.subr.bf16.mxu0 0
        %810 = vmatpush1.bf16.msra.mxu0 0
        %811 = vmatprep.subr.bf16.mxu0 0
        %812 = vmatpush1.bf16.msra.mxu0 0
        %813 = vmatprep.subr.bf16.mxu0 0
        %814 = vmatpush1.bf16.msra.mxu0 0
        %815 = vmatprep.subr.bf16.mxu0 0
        %816 = vmatpush1.bf16.msra.mxu0 0
        %817 = vmatprep.mubr.bf16.mxu0 0
        %818 = vmatmul.mubr.bf16.gmra.mrb[0].mxu0 %v544
        %v819 = vpop.f32.mrb[0].mxu0
        %v820 = vadd.f32 %v732, %v819
        %v821 = vpop.f32.mrb[0].mxu0
        %v822 = vpop.f32.mrb[0].mxu0
        %v823 = vpop.f32.mrb[0].mxu0
        %824 = vdwg.mxu0
        %v825 = vld [vmem:[%s8] sm:$0x1]
        %v827 = vlaneseq
        %v828 = vshrl.u32 %v827, 7
        %v829 = vsub.s32 0, %v828
        %v830 = vrot.slane %v825, %v829
        %v832 = vadd.f32 %v820, %v830
        %vm833 = vcmp.ge.f32.partialorder %v832, 0.0
        %v834 = vstv %s426
        %v835 = vmul.f32 %v834, %v832
        %v836 = vsel %vm833, %v832, %v835
        %v837 = vrot.slane %v836, 4
        %v838 = vadd.f32 %v836, %v837
        %v839 = vrot.slane %v838, 2
        %v840 = vadd.f32 %v838, %v839
        %v841 = vrot.slane %v840, 1
        %v842 = vadd.f32 %v840, %v841
        %v843 = vmul.f32 %v836, %v836
        %v844 = vrot.slane %v843, 4
        %v845 = vadd.f32 %v843, %v844
        %v846 = vrot.slane %v845, 2
        %v847 = vadd.f32 %v845, %v846
        %v848 = vrot.slane %v847, 1
        %v849 = vadd.f32 %v847, %v848
        %v850 = vld [vmem:[%s9] sm:$0xff]
        %v851 = vld [vmem:[%s9 + $0x8] sm:$0xff]
        %v852 = vld [vmem:[%s9 + $0x10] sm:$0xff]
        %v853 = vld [vmem:[%s9 + $0x18] sm:$0xff]
        %v854 = vld [vmem:[%s9 + $0x20] sm:$0xff]
        %v855 = vld [vmem:[%s9 + $0x28] sm:$0xff]
        %v856 = vld [vmem:[%s9 + $0x30] sm:$0xff]
        %v857 = vld [vmem:[%s9 + $0x38] sm:$0xff]
        %v858 = vld [vmem:[%s9 + $0x40] sm:$0xff]
        %v859 = vld [vmem:[%s9 + $0x48] sm:$0xff]
        %v860 = vld [vmem:[%s9 + $0x50] sm:$0xff]
        %v861 = vld [vmem:[%s9 + $0x58] sm:$0xff]
        %v862 = vld [vmem:[%s9 + $0x60] sm:$0xff]
        %v863 = vld [vmem:[%s9 + $0x68] sm:$0xff]
        %v864 = vld [vmem:[%s9 + $0x70] sm:$0xff]
        %v865 = vld [vmem:[%s9 + $0x78] sm:$0xff]
        %866 = vmatprep.subr.mxu0 0.0
        %867 = vmatpush1.msra.mxu0 %v850
        %868 = vmatprep.subr.mxu0 0.0
        %869 = vmatpush1.msra.mxu0 %v851
        %870 = vmatprep.subr.mxu0 0.0
        %871 = vmatpush1.msra.mxu0 %v852
        %872 = vmatprep.subr.mxu0 0.0
        %873 = vmatpush1.msra.mxu0 %v853
        %874 = vmatprep.subr.mxu0 0.0
        %875 = vmatpush1.msra.mxu0 %v854
        %876 = vmatprep.subr.mxu0 0.0
        %877 = vmatpush1.msra.mxu0 %v855
        %878 = vmatprep.subr.mxu0 0.0
        %879 = vmatpush1.msra.mxu0 %v856
        %880 = vmatprep.subr.mxu0 0.0
        %881 = vmatpush1.msra.mxu0 %v857
        %882 = vmatprep.subr.mxu0 0.0
        %883 = vmatpush1.msra.mxu0 %v858
        %884 = vmatprep.subr.mxu0 0.0
        %885 = vmatpush1.msra.mxu0 %v859
        %886 = vmatprep.subr.mxu0 0.0
        %887 = vmatpush1.msra.mxu0 %v860
        %888 = vmatprep.subr.mxu0 0.0
        %889 = vmatpush1.msra.mxu0 %v861
        %890 = vmatprep.subr.mxu0 0.0
        %891 = vmatpush1.msra.mxu0 %v862
        %892 = vmatprep.subr.mxu0 0.0
        %893 = vmatpush1.msra.mxu0 %v863
        %894 = vmatprep.subr.mxu0 0.0
        %895 = vmatpush1.msra.mxu0 %v864
        %896 = vmatprep.subr.mxu0 0.0
        %897 = vmatpush1.msra.mxu0 %v865
        %898 = vmatprep.subr.mxu0 0.0
        %899 = vmatpush1.msra.mxu0 0.0
        %900 = vmatprep.subr.mxu0 0.0
        %901 = vmatpush1.msra.mxu0 0.0
        %902 = vmatprep.subr.mxu0 0.0
        %903 = vmatpush1.msra.mxu0 0.0
        %904 = vmatprep.subr.mxu0 0.0
        %905 = vmatpush1.msra.mxu0 0.0
        %906 = vmatprep.subr.mxu0 0.0
        %907 = vmatpush1.msra.mxu0 0.0
        %908 = vmatprep.subr.mxu0 0.0
        %909 = vmatpush1.msra.mxu0 0.0
        %910 = vmatprep.subr.mxu0 0.0
        %911 = vmatpush1.msra.mxu0 0.0
        %912 = vmatprep.subr.mxu0 0.0
        %913 = vmatpush1.msra.mxu0 0.0
        %914 = vmatprep.subr.mxu0 0.0
        %915 = vmatpush1.msra.mxu0 0.0
        %916 = vmatprep.subr.mxu0 0.0
        %917 = vmatpush1.msra.mxu0 0.0
        %918 = vmatprep.subr.mxu0 0.0
        %919 = vmatpush1.msra.mxu0 0.0
        %920 = vmatprep.subr.mxu0 0.0
        %921 = vmatpush1.msra.mxu0 0.0
        %922 = vmatprep.subr.mxu0 0.0
        %923 = vmatpush1.msra.mxu0 0.0
        %924 = vmatprep.subr.mxu0 0.0
        %925 = vmatpush1.msra.mxu0 0.0
        %926 = vmatprep.subr.mxu0 0.0
        %927 = vmatpush1.msra.mxu0 0.0
        %928 = vmatprep.subr.mxu0 0.0
        %929 = vmatpush1.msra.mxu0 0.0
        %930 = vmatprep.mubr.f32.mxu0 0.0
        %931 = vmatmul.mubr.f32.gmra.mrb[0].mxu0 %v842
        %v932 = vpop.f32.mrb[0].mxu0
        %v933 = vadd.f32 0.0, %v932
        %v934 = vpop.f32.mrb[0].mxu0
        %935 = vdwg.mxu0
        %v936 = vmul.f32 %v933, 0.00390625
        %937 = vmatprep.subr.mxu0 0.0
        %938 = vmatpush1.msra.mxu0 %v850
        %939 = vmatprep.subr.mxu0 0.0
        %940 = vmatpush1.msra.mxu0 %v851
        %941 = vmatprep.subr.mxu0 0.0
        %942 = vmatpush1.msra.mxu0 %v852
        %943 = vmatprep.subr.mxu0 0.0
        %944 = vmatpush1.msra.mxu0 %v853
        %945 = vmatprep.subr.mxu0 0.0
        %946 = vmatpush1.msra.mxu0 %v854
        %947 = vmatprep.subr.mxu0 0.0
        %948 = vmatpush1.msra.mxu0 %v855
        %949 = vmatprep.subr.mxu0 0.0
        %950 = vmatpush1.msra.mxu0 %v856
        %951 = vmatprep.subr.mxu0 0.0
        %952 = vmatpush1.msra.mxu0 %v857
        %953 = vmatprep.subr.mxu0 0.0
        %954 = vmatpush1.msra.mxu0 %v858
        %955 = vmatprep.subr.mxu0 0.0
        %956 = vmatpush1.msra.mxu0 %v859
        %957 = vmatprep.subr.mxu0 0.0
        %958 = vmatpush1.msra.mxu0 %v860
        %959 = vmatprep.subr.mxu0 0.0
        %960 = vmatpush1.msra.mxu0 %v861
        %961 = vmatprep.subr.mxu0 0.0
        %962 = vmatpush1.msra.mxu0 %v862
        %963 = vmatprep.subr.mxu0 0.0
        %964 = vmatpush1.msra.mxu0 %v863
        %965 = vmatprep.subr.mxu0 0.0
        %966 = vmatpush1.msra.mxu0 %v864
        %967 = vmatprep.subr.mxu0 0.0
        %968 = vmatpush1.msra.mxu0 %v865
        %969 = vmatprep.subr.mxu0 0.0
        %970 = vmatpush1.msra.mxu0 0.0
        %971 = vmatprep.subr.mxu0 0.0
        %972 = vmatpush1.msra.mxu0 0.0
        %973 = vmatprep.subr.mxu0 0.0
        %974 = vmatpush1.msra.mxu0 0.0
        %975 = vmatprep.subr.mxu0 0.0
        %976 = vmatpush1.msra.mxu0 0.0
        %977 = vmatprep.subr.mxu0 0.0
        %978 = vmatpush1.msra.mxu0 0.0
        %979 = vmatprep.subr.mxu0 0.0
        %980 = vmatpush1.msra.mxu0 0.0
        %981 = vmatprep.subr.mxu0 0.0
        %982 = vmatpush1.msra.mxu0 0.0
        %983 = vmatprep.subr.mxu0 0.0
        %984 = vmatpush1.msra.mxu0 0.0
        %985 = vmatprep.subr.mxu0 0.0
        %986 = vmatpush1.msra.mxu0 0.0
        %987 = vmatprep.subr.mxu0 0.0
        %988 = vmatpush1.msra.mxu0 0.0
        %989 = vmatprep.subr.mxu0 0.0
        %990 = vmatpush1.msra.mxu0 0.0
        %991 = vmatprep.subr.mxu0 0.0
        %992 = vmatpush1.msra.mxu0 0.0
        %993 = vmatprep.subr.mxu0 0.0
        %994 = vmatpush1.msra.mxu0 0.0
        %995 = vmatprep.subr.mxu0 0.0
        %996 = vmatpush1.msra.mxu0 0.0
        %997 = vmatprep.subr.mxu0 0.0
        %998 = vmatpush1.msra.mxu0 0.0
        %999 = vmatprep.subr.mxu0 0.0
        %1000 = vmatpush1.msra.mxu0 0.0
        %1001 = vmatprep.mubr.f32.mxu0 0.0
        %1002 = vmatmul.mubr.f32.gmra.mrb[0].mxu0 %v849
        %v1003 = vpop.f32.mrb[0].mxu0
        %v1004 = vadd.f32 0.0, %v1003
        %v1005 = vpop.f32.mrb[0].mxu0
        %1006 = vdwg.mxu0
        %v1007 = vmul.f32 %v1004, 0.00390625
        %v1008 = vmul.f32 %v936, %v936
        %v1009 = vsub.f32 %v1007, %v1008
        %v1010 = vmax.f32 %v1009, 0.0
        %v1011 = vadd.f32 %v1010, 1e-05
        %v1012 = vrsqrt.pop %v1011
        %v1013 = vld [vmem:[%s10] sm:$0xf]
        %vm1014 = vcmask 31744
        %v1016 = vsel %vm1014, %v936, 0
        %vm1018 = vcmask 1043456
        %v1020 = vsel %vm1018, %v1013, 0
        %1022 = vmatprep.subr.mxu0 0.0
        %1023 = vmatpush1.msra.mxu0 %v1020
        %1024 = vmatprep.subr.mxu0 0.0
        %1025 = vmatpush1.msra.mxu0 0.0
        %1026 = vmatprep.subr.mxu0 0.0
        %1027 = vmatpush1.msra.mxu0 0.0
        %1028 = vmatprep.subr.mxu0 0.0
        %1029 = vmatpush1.msra.mxu0 0.0
        %1030 = vmatprep.subr.mxu0 0.0
        %1031 = vmatpush1.msra.mxu0 0.0
        %1032 = vmatprep.subr.mxu0 0.0
        %1033 = vmatpush1.msra.mxu0 0.0
        %1034 = vmatprep.subr.mxu0 0.0
        %1035 = vmatpush1.msra.mxu0 0.0
        %1036 = vmatprep.subr.mxu0 0.0
        %1037 = vmatpush1.msra.mxu0 0.0
        %1038 = vmatprep.subr.mxu0 0.0
        %1039 = vmatpush1.msra.mxu0 0.0
        %1040 = vmatprep.subr.mxu0 0.0
        %1041 = vmatpush1.msra.mxu0 0.0
        %1042 = vmatprep.subr.mxu0 0.0
        %1043 = vmatpush1.msra.mxu0 0.0
        %1044 = vmatprep.subr.mxu0 0.0
        %1045 = vmatpush1.msra.mxu0 0.0
        %1046 = vmatprep.subr.mxu0 0.0
        %1047 = vmatpush1.msra.mxu0 0.0
        %1048 = vmatprep.subr.mxu0 0.0
        %1049 = vmatpush1.msra.mxu0 0.0
        %1050 = vmatprep.subr.mxu0 0.0
        %1051 = vmatpush1.msra.mxu0 0.0
        %1052 = vmatprep.subr.mxu0 0.0
        %1053 = vmatpush1.msra.mxu0 0.0
        %1054 = vmatprep.subr.mxu0 0.0
        %1055 = vmatpush1.msra.mxu0 0.0
        %1056 = vmatprep.subr.mxu0 0.0
        %1057 = vmatpush1.msra.mxu0 0.0
        %1058 = vmatprep.subr.mxu0 0.0
        %1059 = vmatpush1.msra.mxu0 0.0
        %1060 = vmatprep.subr.mxu0 0.0
        %1061 = vmatpush1.msra.mxu0 0.0
        %1062 = vmatprep.subr.mxu0 0.0
        %1063 = vmatpush1.msra.mxu0 0.0
        %1064 = vmatprep.subr.mxu0 0.0
        %1065 = vmatpush1.msra.mxu0 0.0
        %1066 = vmatprep.subr.mxu0 0.0
        %1067 = vmatpush1.msra.mxu0 0.0
        %1068 = vmatprep.subr.mxu0 0.0
        %1069 = vmatpush1.msra.mxu0 0.0
        %1070 = vmatprep.subr.mxu0 0.0
        %1071 = vmatpush1.msra.mxu0 0.0
        %1072 = vmatprep.subr.mxu0 0.0
        %1073 = vmatpush1.msra.mxu0 0.0
        %1074 = vmatprep.subr.mxu0 0.0
        %1075 = vmatpush1.msra.mxu0 0.0
        %1076 = vmatprep.subr.mxu0 0.0
        %1077 = vmatpush1.msra.mxu0 0.0
        %1078 = vmatprep.subr.mxu0 0.0
        %1079 = vmatpush1.msra.mxu0 0.0
        %1080 = vmatprep.subr.mxu0 0.0
        %1081 = vmatpush1.msra.mxu0 0.0
        %1082 = vmatprep.subr.mxu0 0.0
        %1083 = vmatpush1.msra.mxu0 0.0
        %1084 = vmatprep.subr.mxu0 0.0
        %1085 = vmatpush1.msra.mxu0 0.0
        %1086 = vmatprep.mubr.f32.mxu0 0.0
        %1087 = vmatmul.mubr.f32.gmra.mrb[0].mxu0 %v1016
        %v1088 = vpop.f32.mrb[0].mxu0
        %v1089 = vadd.f32 0.0, %v1088
        %v1090 = vpop.f32.mrb[0].mxu0
        %1091 = vdwg.mxu0
        %v1093 = vsel %vm1014, %v1012, 0
        %1095 = vmatprep.subr.mxu0 0.0
        %1096 = vmatpush1.msra.mxu0 %v1020
        %1097 = vmatprep.subr.mxu0 0.0
        %1098 = vmatpush1.msra.mxu0 0.0
        %1099 = vmatprep.subr.mxu0 0.0
        %1100 = vmatpush1.msra.mxu0 0.0
        %1101 = vmatprep.subr.mxu0 0.0
        %1102 = vmatpush1.msra.mxu0 0.0
        %1103 = vmatprep.subr.mxu0 0.0
        %1104 = vmatpush1.msra.mxu0 0.0
        %1105 = vmatprep.subr.mxu0 0.0
        %1106 = vmatpush1.msra.mxu0 0.0
        %1107 = vmatprep.subr.mxu0 0.0
        %1108 = vmatpush1.msra.mxu0 0.0
        %1109 = vmatprep.subr.mxu0 0.0
        %1110 = vmatpush1.msra.mxu0 0.0
        %1111 = vmatprep.subr.mxu0 0.0
        %1112 = vmatpush1.msra.mxu0 0.0
        %1113 = vmatprep.subr.mxu0 0.0
        %1114 = vmatpush1.msra.mxu0 0.0
        %1115 = vmatprep.subr.mxu0 0.0
        %1116 = vmatpush1.msra.mxu0 0.0
        %1117 = vmatprep.subr.mxu0 0.0
        %1118 = vmatpush1.msra.mxu0 0.0
        %1119 = vmatprep.subr.mxu0 0.0
        %1120 = vmatpush1.msra.mxu0 0.0
        %1121 = vmatprep.subr.mxu0 0.0
        %1122 = vmatpush1.msra.mxu0 0.0
        %1123 = vmatprep.subr.mxu0 0.0
        %1124 = vmatpush1.msra.mxu0 0.0
        %1125 = vmatprep.subr.mxu0 0.0
        %1126 = vmatpush1.msra.mxu0 0.0
        %1127 = vmatprep.subr.mxu0 0.0
        %1128 = vmatpush1.msra.mxu0 0.0
        %1129 = vmatprep.subr.mxu0 0.0
        %1130 = vmatpush1.msra.mxu0 0.0
        %1131 = vmatprep.subr.mxu0 0.0
        %1132 = vmatpush1.msra.mxu0 0.0
        %1133 = vmatprep.subr.mxu0 0.0
        %1134 = vmatpush1.msra.mxu0 0.0
        %1135 = vmatprep.subr.mxu0 0.0
        %1136 = vmatpush1.msra.mxu0 0.0
        %1137 = vmatprep.subr.mxu0 0.0
        %1138 = vmatpush1.msra.mxu0 0.0
        %1139 = vmatprep.subr.mxu0 0.0
        %1140 = vmatpush1.msra.mxu0 0.0
        %1141 = vmatprep.subr.mxu0 0.0
        %1142 = vmatpush1.msra.mxu0 0.0
        %1143 = vmatprep.subr.mxu0 0.0
        %1144 = vmatpush1.msra.mxu0 0.0
        %1145 = vmatprep.subr.mxu0 0.0
        %1146 = vmatpush1.msra.mxu0 0.0
        %1147 = vmatprep.subr.mxu0 0.0
        %1148 = vmatpush1.msra.mxu0 0.0
        %1149 = vmatprep.subr.mxu0 0.0
        %1150 = vmatpush1.msra.mxu0 0.0
        %1151 = vmatprep.subr.mxu0 0.0
        %1152 = vmatpush1.msra.mxu0 0.0
        %1153 = vmatprep.subr.mxu0 0.0
        %1154 = vmatpush1.msra.mxu0 0.0
        %1155 = vmatprep.subr.mxu0 0.0
        %1156 = vmatpush1.msra.mxu0 0.0
        %1157 = vmatprep.subr.mxu0 0.0
        %1158 = vmatpush1.msra.mxu0 0.0
        %1159 = vmatprep.mubr.f32.mxu0 0.0
        %1160 = vmatmul.mubr.f32.gmra.mrb[0].mxu0 %v1093
        %v1161 = vpop.f32.mrb[0].mxu0
        %v1162 = vadd.f32 0.0, %v1161
        %v1163 = vpop.f32.mrb[0].mxu0
        %1164 = vdwg.mxu0
        %v1165 = vld [vmem:[%s11] sm:$0x3]
        %v1166 = vmul.f32 %v1162, %v1165
        %v1167 = vmul.f32 %v1089, %v1166
        %v1169 = vrot.slane %v1167, 7
        %v1171 = vsub.f32 %v1165, %v1169
        %v1172 = vlaneseq
        %v1173 = vshrl.u32 %v1172, 7
        %v1174 = vsub.s32 0, %v1173
        %v1175 = vrot.slane %v1166, %v1174
        %v1176 = vmul.f32 %v836, %v1175
        %v1177 = vadd.f32 %v427, %v1176
        %v1178 = vlaneseq
        %v1179 = vshrl.u32 %v1178, 7
        %v1180 = vsub.s32 1, %v1179
        %v1181 = vrot.slane %v1171, %v1180
        %v1182 = vadd.f32 %v1177, %v1181
        %1183 = vst [vmem:[%s422] sm:$0xff] %v1182
        %p1184 = scmp.lt.s32.totalorder %s24, 1
        %s1185 = scalar_select %p1184, %s24, 1
        %s1186 = smul.addr %s1185, 8
        %s1187 = scalar_lea.vmem %s12, %s1186
        // Predicated region
        $region73: #{tac_forward.1} parent=67 // pred_check
          %p1188 = pneg %p299
        $region74: #{tac_forward.1} parent=67 // pred_check_branch
          %1190 = sbr.rel (%p1188) target = $region76
        $region75: #{tac_forward.1} parent=67 // pred_region
          _
        $region76: #{tac_forward.1} parent=67 // pred_fallthru
          _
      $region68: #{tac_forward.1} parent=5 // pred_fallthru
        _
      %p1191 = scmp.le.s32.totalorder 2, %s19
      // Predicated region
      $region77: #{tac_forward.1} parent=5 // pred_check
        %p1192 = pneg %p1191
      $region78: #{tac_forward.1} parent=5 // pred_check_branch
        %1194 = sbr.rel (%p1192) target = $region80
      $region79: #{tac_forward.1} parent=5 // pred_region
        %s1195 = ssub.s32 %s19, 2
        // Predicated region
        $region81: #{tac_forward.1} parent=79 // pred_check
          %p1196 = pneg %p305
        $region82: #{tac_forward.1} parent=79 // pred_check_branch
          %1198 = sbr.rel (%p1196) target = $region84
        $region83: #{tac_forward.1} parent=79 // pred_region
          %p1199 = scmp.lt.s32.totalorder %s25, 1
          %s1200 = scalar_select %p1199, %s25, 1
          %s1201 = smul.addr %s1200, 8
          %s1202 = scalar_lea.vmem %s12, %s1201
        $region84: #{tac_forward.1} parent=79 // pred_fallthru
          _
      $region80: #{tac_forward.1} parent=5 // pred_fallthru
        _
    $region6: #{tac_forward.1} parent=1 // loop_footer
      %s23 = sadd.s32 1, %s19
    $region7: #{tac_forward.1} parent=1 // loop_footer_branch
      %18 = sbr.rel target = $region3
    $region8: #{tac_forward.1} parent=1 // loop_exit
      _
    %1203 = vsyncpa [#allocation3], 1
    %s1204 = scalar_lea.sflag [#allocation3], 1
    %1205 = vsyncpa %s1204, 1

</llo_original>
